<compile_context>
chip_gen: v6e
topology: v6e:2x2x1
jax: 0.10.0
libtpu: 0.0.40
codegen_flags: <defaults>
</compile_context>

<pallas_src>
import jax
import jax.numpy as jnp
from jax.experimental import pallas as pl
from jax.experimental.pallas import tpu as pltpu


_LANE = 128
_STREAM_TILE_BYTES = 2 << 20      # ~2 MiB per-stream tile; 3 streams x 2 bufs ~= 12 MiB
_VMEM_LIMIT_BYTES = 32 << 20      # explicit: > v5e 16 MiB default, <= v7x 32 MiB scope
_MEGACORE_MIN_BYTES = 1 << 20     # only force a >=2-step parallel grid when it matters


def _ceil_to(v, m):
    return -(-v // m) * m


def _largest_aligned_divisor(total, align, cap):
    """Largest multiple of `align` that divides `total` and is <= cap.

    Assumes total % align == 0 and cap >= align.  Keeps tiles as exact divisors
    of the 128/8-aligned extent, so no padded bytes beyond minimal alignment.
    """
    q = total // align
    limit = max(1, cap // align)
    best = 1
    d = 1
    while d * d <= q:
        if q % d == 0:
            lo, hi = d, q // d
            if lo <= limit and lo > best:
                best = lo
            if hi <= limit and hi > best:
                best = hi
        d += 1
    return best * align


def _scale_skip_kernel(x_ref, skip_ref, p_ref, o_ref):
    # x_ref / skip_ref / o_ref : (r_tile, hw_tile) data tiles
    # p_ref                    : (r_tile, 3) f32 per-row params
    #                            [:, 0] = x_scale, [:, 1] = y_scale, [:, 2] = bias sum
    p = p_ref[...]
    xs = p[:, 0:1]
    ys = p[:, 1:2]
    b = p[:, 2:3]
    out = xs * x_ref[...] + ys * skip_ref[...] + b
    o_ref[...] = out.astype(o_ref.dtype)


def scale_skip_2d(x, skip, x_scale, x_bias, y_scale, y_bias):
    """Eval-mode ScaleSkip2D.  x, skip: (N, C, H, W); params: (1, C, 1, 1)."""
    N, C, H, W = x.shape
    HW = H * W
    R = N * C
    itemsize = x.dtype.itemsize

    # Sublane-dense rows: fold batch and channel together.
    x2 = x.reshape(R, HW)
    s2 = skip.reshape(R, HW)

    # Per-row params packed into one (R, 3) f32 array.  Biases pre-summed
    # (re-associates FP adds vs the PyTorch reference by ~1 ulp).
    xs = jnp.tile(x_scale.reshape(C).astype(jnp.float32), N)
    ys = jnp.tile(y_scale.reshape(C).astype(jnp.float32), N)
    b = jnp.tile((x_bias + y_bias).reshape(C).astype(jnp.float32), N)
    params = jnp.stack([xs, ys, b], axis=-1)              # (R, 3)

    # ---- tile selection -----------------------------------------------------
    sub = max(8, 32 // itemsize)          # 8 for f32, 16 for bf16, 32 for 8-bit
    hw_pad = _ceil_to(HW, _LANE)
    r_pad = _ceil_to(R, sub)

    # Prefer full-width lane tiles (contiguous HBM slab per block DMA);
    # otherwise the largest 128-multiple divisor fitting the budget.
    max_lanes = max(_LANE, _STREAM_TILE_BYTES // (sub * itemsize))
    hw_tile = _largest_aligned_divisor(hw_pad, _LANE, max_lanes)

    max_rows = max(sub, _STREAM_TILE_BYTES // (hw_tile * itemsize))
    r_tile = _largest_aligned_divisor(r_pad, sub, max_rows)

    # Megacore (v7x): guarantee >= 2 iterations on a parallel axis when there
    # is enough work for both TensorCores to matter (prefer splitting rows so
    # the leading parallel axis is the one that splits).
    if R * HW * itemsize >= _MEGACORE_MIN_BYTES and r_pad // r_tile == 1:
        if r_pad >= 2 * sub:
            r_tile = _largest_aligned_divisor(r_pad, sub, max(sub, r_pad // 2))
        elif hw_pad // hw_tile == 1 and hw_pad >= 2 * _LANE:
            hw_tile = _largest_aligned_divisor(hw_pad, _LANE, max(_LANE, hw_pad // 2))

    grid = (pl.cdiv(R, r_tile), pl.cdiv(HW, hw_tile))

    data_spec = pl.BlockSpec((r_tile, hw_tile), lambda i, j: (i, j))
    param_spec = pl.BlockSpec((r_tile, 3), lambda i, j: (i, 0))

    # Memory-bound: tell XLA's scheduler so it can overlap surrounding ops.
    cost = pl.CostEstimate(
        flops=4 * R * HW,
        transcendentals=0,
        bytes_accessed=3 * R * HW * itemsize + params.size * params.dtype.itemsize,
    )

    out = pl.pallas_call(
        _scale_skip_kernel,
        out_shape=jax.ShapeDtypeStruct((R, HW), x.dtype),
        grid_spec=pltpu.PrefetchScalarGridSpec(
            num_scalar_prefetch=0,
            grid=grid,
            in_specs=[data_spec, data_spec, param_spec],
            out_specs=data_spec,
        ),
        compiler_params=pltpu.CompilerParams(
            dimension_semantics=("parallel", "parallel"),
            vmem_limit_bytes=_VMEM_LIMIT_BYTES,
        ),
        cost_estimate=cost,
    )(x2, s2, params)

    return out.reshape(N, C, H, W)


if __name__ == "__main__":
    key = jax.random.PRNGKey(0)
    k_x, k_skip, k_ys, k_yb, k_xs, k_xb = jax.random.split(key, 6)

    N, C, H, W = 2, 4, 16, 16

    x = jax.random.normal(k_x, (N, C, H, W), dtype=jnp.float32)
    skip = jax.random.normal(k_skip, (N, C, H, W), dtype=jnp.float32)

    # Deterministic parameter init matching the module's __init__:
    #   normal(mean=1.0, std=0.02) for scales, normal(mean=0.0, std=0.02) for biases.
    y_skipscale = 1.0 + 0.02 * jax.random.normal(k_ys, (1, C, 1, 1), dtype=jnp.float32)
    y_skipbias = 0.02 * jax.random.normal(k_yb, (1, C, 1, 1), dtype=jnp.float32)
    x_skipscale = 1.0 + 0.02 * jax.random.normal(k_xs, (1, C, 1, 1), dtype=jnp.float32)
    x_skipbias = 0.02 * jax.random.normal(k_xb, (1, C, 1, 1), dtype=jnp.float32)

    out = scale_skip_2d(x, skip, x_skipscale, x_skipbias, y_skipscale, y_skipbias)
    out = jax.block_until_ready(out)

    # Pure-JAX reference (same eval-mode semantics as the PyTorch module).
    ref = (x_skipscale * x + x_skipbias) + (y_skipscale * skip + y_skipbias)
    assert out.shape == (N, C, H, W)
    assert jnp.allclose(out, ref, atol=1e-6, rtol=1e-6)

    print("KERNEL_OK")
</pallas_src>

<mosaic_0001>
module attributes {stable_mosaic.version = 11 : i64} {
  func.func @_scale_skip_kernel(%arg0: i32, %arg1: i32, %arg2: memref<8x256xf32, #tpu.memory_space<vmem>>, %arg3: memref<8x256xf32, #tpu.memory_space<vmem>>, %arg4: memref<8x3xf32, #tpu.memory_space<vmem>>, %arg5: memref<8x256xf32, #tpu.memory_space<vmem>>) attributes {dimension_semantics = [#tpu.dimension_semantics<parallel>, #tpu.dimension_semantics<parallel>], iteration_bounds = array<i64: 1, 1>, scalar_prefetch = 0 : i64, scratch_operands = 0 : i64, tpu.core_type = #tpu.core_type<tc>, window_params = [{transform_indices = @transform_0, window_bounds = array<i64: 8, 256>}, {transform_indices = @transform_1, window_bounds = array<i64: 8, 256>}, {transform_indices = @transform_2, window_bounds = array<i64: 8, 3>}, {transform_indices = @transform_3, window_bounds = array<i64: 8, 256>}]} {
    %c0 = arith.constant 0 : index
    %c0_0 = arith.constant 0 : index
    %0 = vector.load %arg4[%c0, %c0_0] : memref<8x3xf32, #tpu.memory_space<vmem>>, vector<8x3xf32>
    %1 = vector.extract_strided_slice %0 {offsets = [0, 0], sizes = [8, 1], strides = [1, 1]} : vector<8x3xf32> to vector<8x1xf32>
    %2 = vector.extract_strided_slice %0 {offsets = [0, 1], sizes = [8, 1], strides = [1, 1]} : vector<8x3xf32> to vector<8x1xf32>
    %3 = vector.extract_strided_slice %0 {offsets = [0, 2], sizes = [8, 1], strides = [1, 1]} : vector<8x3xf32> to vector<8x1xf32>
    %c0_1 = arith.constant 0 : index
    %c0_2 = arith.constant 0 : index
    %4 = vector.load %arg2[%c0_1, %c0_2] : memref<8x256xf32, #tpu.memory_space<vmem>>, vector<8x256xf32>
    %5 = vector.broadcast %1 : vector<8x1xf32> to vector<8x256xf32>
    %6 = arith.mulf %5, %4 : vector<8x256xf32>
    %c0_3 = arith.constant 0 : index
    %c0_4 = arith.constant 0 : index
    %7 = vector.load %arg3[%c0_3, %c0_4] : memref<8x256xf32, #tpu.memory_space<vmem>>, vector<8x256xf32>
    %8 = vector.broadcast %2 : vector<8x1xf32> to vector<8x256xf32>
    %9 = arith.mulf %8, %7 : vector<8x256xf32>
    %10 = arith.addf %6, %9 : vector<8x256xf32>
    %11 = vector.broadcast %3 : vector<8x1xf32> to vector<8x256xf32>
    %12 = arith.addf %10, %11 : vector<8x256xf32>
    %c0_5 = arith.constant 0 : index
    %c0_6 = arith.constant 0 : index
    %13 = vector.load %arg5[%c0_5, %c0_6] : memref<8x256xf32, #tpu.memory_space<vmem>>, vector<8x256xf32>
    tpu.vector_store %arg5[%c0_5, %c0_6], %12 {strides = array<i32>} : memref<8x256xf32, #tpu.memory_space<vmem>>, vector<8x256xf32>,
    return
  }
  func.func @transform_0(%arg0: i32, %arg1: i32) -> (i32, i32) {
    %c0_i32 = arith.constant 0 : i32
    return %arg0, %arg1 : i32, i32
  }
  func.func @transform_1(%arg0: i32, %arg1: i32) -> (i32, i32) {
    %c0_i32 = arith.constant 0 : i32
    return %arg0, %arg1 : i32, i32
  }
  func.func @transform_2(%arg0: i32, %arg1: i32) -> (i32, i32) {
    %c0_i32 = arith.constant 0 : i32
    %c0_i32_0 = arith.constant 0 : i32
    return %arg0, %c0_i32 : i32, i32
  }
  func.func @transform_3(%arg0: i32, %arg1: i32) -> (i32, i32) {
    %c0_i32 = arith.constant 0 : i32
    return %arg0, %arg1 : i32, i32
  }
}

</mosaic_0001>

<llo_original>
// kernel: tpu_custom_call.1
$region0: #{tpu_custom_call.1}
  #allocation0 [shape = 'u32[]', space=smem, size = 0x4, offset = 0x4, fixed_abs, tag = 'smem constant byte address 0x4 - core index']
  #allocation1 [shape = 'u32[144,128]{1,0:T(1,128)}', space=vmem, size = 0x12000, scoped, tag = 'internal scratch']
  %s0 = inlined_call_operand.hbm [shape: f32[8,256], index: 0, kind: input, shape index: {}]
  %s1 = inlined_call_operand.hbm [shape: f32[8,256], index: 1, kind: input, shape index: {}]
  %s2 = inlined_call_operand.vmem [shape: f32[8,3], index: 2, kind: input, shape index: {}]
  %s3 = inlined_call_operand.hbm [shape: f32[8,256], index: 3, kind: output, shape index: {}]
  %s4 = sld [smem:[#allocation0]]
  $region30: #{tpu_custom_call.1} parent=0
    _
  %s6 = ssub.s32 1, %s4
  %s7 = scalar_select 0, %s6, %s4
  $region1: #{tpu_custom_call.1} parent=0
    #allocation2 [shape = 'u8[8192]{0}', space=vmem, size = 0x2000, scoped, tag = 'input window, operand 0, single buffered']
    #allocation3 [shape = 's32[1]{0}', space=sflag, size = 0x4, scoped, tag = 'scoped memory for tpu_custom_call.1']
    #allocation4 [shape = 's32[1]{0}', space=sflag, size = 0x4, scoped, tag = 'scoped memory for tpu_custom_call.1']
    #allocation5 [shape = 'u8[8192]{0}', space=vmem, size = 0x2000, scoped, tag = 'input window, operand 1, single buffered']
    #allocation6 [shape = 's32[1]{0}', space=sflag, size = 0x4, scoped, tag = 'scoped memory for tpu_custom_call.1']
    #allocation7 [shape = 'u8[8192]{0}', space=vmem, size = 0x2000, scoped, tag = 'output window, operand 0, single buffered']
    %8 = vsyncpa [#allocation3], 0
    %9 = vsyncpa [#allocation6], 0
    %10 = vsyncpa [#allocation4], 0
    // Predicated region
    $region2: #{tpu_custom_call.1} parent=1 // pred_check
      _
    $region3: #{tpu_custom_call.1} parent=1 // pred_check_branch
      %12 = sbr.rel (0) target = $region5
    $region4: #{tpu_custom_call.1} parent=1 // pred_region
      %s14 = ssub.s32 256, 256
      %15 = vsyncadd [#allocation3], %s14
      %s17 = sshll.u32 [#allocation2], 4
      %s18 = int_to_ptr.vmem [resolvable:$true] %s17
      %20 = dma.hbm_to_vmem [thread:$0]  %s0, 256, %s18, [#allocation3]
    $region5: #{tpu_custom_call.1} parent=1 // pred_fallthru
      _
    // Predicated region
    $region6: #{tpu_custom_call.1} parent=1 // pred_check
      _
    $region7: #{tpu_custom_call.1} parent=1 // pred_check_branch
      %22 = sbr.rel (0) target = $region9
    $region8: #{tpu_custom_call.1} parent=1 // pred_region
      %s24 = ssub.s32 256, 256
      %25 = vsyncadd [#allocation6], %s24
      %s27 = sshll.u32 [#allocation5], 4
      %s28 = int_to_ptr.vmem [resolvable:$true] %s27
      %30 = dma.hbm_to_vmem [thread:$0]  %s1, 256, %s28, [#allocation6]
    $region9: #{tpu_custom_call.1} parent=1 // pred_fallthru
      _
    // Predicated region
    $region10: #{tpu_custom_call.1} parent=1 // pred_check
      _
    $region11: #{tpu_custom_call.1} parent=1 // pred_check_branch
      %32 = sbr.rel (0) target = $region13
    $region12: #{tpu_custom_call.1} parent=1 // pred_region
      _
    $region13: #{tpu_custom_call.1} parent=1 // pred_fallthru
      _
    // Predicated region
    $region14: #{tpu_custom_call.1} parent=1 // pred_check
      _
    $region15: #{tpu_custom_call.1} parent=1 // pred_check_branch
      %34 = sbr.rel (0) target = $region17
    $region16: #{tpu_custom_call.1} parent=1 // pred_region
      %35 = dma.done [#allocation3], 256
    $region17: #{tpu_custom_call.1} parent=1 // pred_fallthru
      _
    // Predicated region
    $region18: #{tpu_custom_call.1} parent=1 // pred_check
      _
    $region19: #{tpu_custom_call.1} parent=1 // pred_check_branch
      %37 = sbr.rel (0) target = $region21
    $region20: #{tpu_custom_call.1} parent=1 // pred_region
      %38 = dma.done [#allocation6], 256
    $region21: #{tpu_custom_call.1} parent=1 // pred_fallthru
      _
    %v39 = vld [vmem:[%s2] sm:$0xff]
    %v40 = vld [vmem:[#allocation2] sm:$0xff]
    %v41 = vld [vmem:[#allocation2 + $0x8] sm:$0xff]
    %43 = vset.pattern.permute.xlu0 0
    %44 = vperm.xlu0 %43, %v39
    %v45 = vpop.permute.xlu0 %44
    %v47 = vmul.f32 %v45, %v40
    %v48 = vmul.f32 %v45, %v41
    %v49 = vld [vmem:[#allocation5] sm:$0xff]
    %v50 = vld [vmem:[#allocation5 + $0x8] sm:$0xff]
    %51 = vset.pattern.permute.xlu0 1
    %52 = vperm.xlu0 %51, %v39
    %v53 = vpop.permute.xlu0 %52
    %v55 = vmul.f32 %v53, %v49
    %v56 = vmul.f32 %v53, %v50
    %v57 = vadd.f32 %v47, %v55
    %v58 = vadd.f32 %v48, %v56
    %59 = vset.pattern.permute.xlu0 2
    %60 = vperm.xlu0 %59, %v39
    %v61 = vpop.permute.xlu0 %60
    %v63 = vadd.f32 %v57, %v61
    %v64 = vadd.f32 %v58, %v61
    %65 = vst [vmem:[#allocation7] sm:$0xff] %v63
    %66 = vst [vmem:[#allocation7 + $0x8] sm:$0xff] %v64
    // Predicated region
    $region22: #{tpu_custom_call.1} parent=1 // pred_check
      _
    $region23: #{tpu_custom_call.1} parent=1 // pred_check_branch
      %68 = sbr.rel (0) target = $region25
    $region24: #{tpu_custom_call.1} parent=1 // pred_region
      %s70 = ssub.s32 256, 256
      %71 = vsyncadd [#allocation4], %s70
      %s73 = sshll.u32 [#allocation7], 4
      %s74 = int_to_ptr.vmem [resolvable:$true] %s73
      %76 = dma.vmem_to_hbm [thread:$0]  %s74, 256, %s3, [#allocation4]
    $region25: #{tpu_custom_call.1} parent=1 // pred_fallthru
      _
    // Predicated region
    $region26: #{tpu_custom_call.1} parent=1 // pred_check
      _
    $region27: #{tpu_custom_call.1} parent=1 // pred_check_branch
      %78 = sbr.rel (0) target = $region29
    $region28: #{tpu_custom_call.1} parent=1 // pred_region
      %79 = dma.done [#allocation4], 256
    $region29: #{tpu_custom_call.1} parent=1 // pred_fallthru
      _
    %80 = vsyncpa [#allocation3], 1
    %81 = vsyncpa [#allocation6], 1
    %82 = vsyncpa [#allocation4], 1

</llo_original>
